<compile_context>
chip_gen: v7x
topology: tpu7x:2x2x1
jax: 0.10.0
libtpu: 0.0.40
codegen_flags: <defaults>
</compile_context>

<pallas_src>
import functools

import numpy as np
import jax
import jax.numpy as jnp
from jax.experimental import pallas as pl
from jax.experimental.pallas import tpu as pltpu

NUM_ROUTING_ITERATIONS = 3


def _digitcaps_kernel(x_ref, w_ref, out_ref, *, B, I, O, C, n_iter):
    # x_ref  : (B*I, R)   input capsules, routes on lanes, row (b*I + i) = x[b, :, i]
    # w_ref  : (C*I, O, R) weights, row-block (c*I + i) = W[:, c, :, i] as (O, R)
    # out_ref: (C*B, O, 1) output capsule vectors, row-block (c*B + b)
    _, R = x_ref.shape
    inv_R = 1.0 / R
    inv_B = 1.0 / B

    @pl.loop(0, C)
    def _per_capsule(c):
        # ---- u_hat for capsule c:  u[b][o, r] = sum_i W[r,c,o,i] * x[b,r,i] ----
        # Accumulate over i on the VALU; each weight slice is a contiguous,
        # lane-aligned (O, R) block thanks to the (C*I, O, R) pre-layout.
        u = []
        for b in range(B):
            acc = None
            for i in range(I):
                w_ci = w_ref[c * I + i]                    # (O, R)
                x_bi = x_ref[pl.ds(b * I + i, 1), :]       # (1, R) -> sublane-bcast in the mul
                term = w_ci * x_bi
                acc = term if acc is None else acc + term
            u.append(acc)                                  # (O, R)

        # ---- dynamic routing (logits shared across the batch, as in the ref) ----
        b_log = jnp.zeros((1, R), jnp.float32)
        v = None
        for it in range(n_iter):
            if it == 0:
                # b_log == 0  =>  softmax over routes is exactly 1/R.
                s = [jnp.sum(u[b], axis=-1, keepdims=True) * inv_R
                     for b in range(B)]                               # (O, 1)
            else:
                m = jnp.max(b_log, axis=-1, keepdims=True)            # (1, 1)
                e = jnp.exp(b_log - m)                                # (1, R)
                inv_sum = 1.0 / jnp.sum(e, axis=-1, keepdims=True)    # exact divide
                # Deferred normalization: weight by e, rescale s_j by 1/sum(e).
                s = [jnp.sum(u[b] * e, axis=-1, keepdims=True) * inv_sum
                     for b in range(B)]                               # (O, 1)

            # squash (elementwise here; exact division -> no error feedback)
            v = [sb * jnp.abs(sb) / (1.0 + sb * sb) for sb in s]      # (O, 1)

            if it < n_iter - 1:
                # a[b][r] = sum_o u[b][o,r] * v[b][o];  b_ij += mean over batch
                a_mean = None
                for b in range(B):
                    a_b = jnp.sum(u[b] * v[b], axis=0, keepdims=True)  # (1, R)
                    a_mean = a_b if a_mean is None else a_mean + a_b
                b_log = b_log + a_mean * inv_B

        for b in range(B):
            out_ref[c * B + b] = v[b]                                 # (O, 1)


def prepare_digitcaps_weight(W):
    """(R, C, O, I) torch-param layout (leading 1 squeezed) -> (C*I, O, R).

    W is a parameter: this layout change happens ONCE at init, not per call.
    """
    R, C, O, I = W.shape
    return jnp.transpose(W, (1, 3, 2, 0)).reshape(C * I, O, R).astype(jnp.float32)


def digit_caps_forward(x, w_prep, *, in_channels=8):
    """x: (B, R, I);  w_prep: (C*I, O, R) pre-laid-out param  ->  (B, C, O, 1)."""
    B, R, I = x.shape
    assert I == in_channels
    CI, O, Rw = w_prep.shape
    assert Rw == R
    C = CI // I

    # Activation layout: routes on lanes; row (b*I + i) holds x[b, :, i].
    x2 = jnp.transpose(x, (0, 2, 1)).reshape(B * I, R).astype(jnp.float32)

    kernel = functools.partial(_digitcaps_kernel, B=B, I=I, O=O, C=C,
                               n_iter=NUM_ROUTING_ITERATIONS)

    cost = pl.CostEstimate(
        flops=int(2 * C * B * O * R * (I + 2 * NUM_ROUTING_ITERATIONS - 1)),
        transcendentals=int((NUM_ROUTING_ITERATIONS - 1) * C * R),
        bytes_accessed=int(4 * (x2.size + w_prep.size + C * B * O)),
    )

    out = pl.pallas_call(
        kernel,
        out_shape=jax.ShapeDtypeStruct((C * B, O, 1), jnp.float32),
        grid=(1,),
        in_specs=[
            pl.BlockSpec((B * I, R), lambda g: (0, 0)),
            pl.BlockSpec((CI, O, R), lambda g: (0, 0, 0)),
        ],
        out_specs=pl.BlockSpec((C * B, O, 1), lambda g: (0, 0, 0)),
        compiler_params=pltpu.CompilerParams(dimension_semantics=("arbitrary",)),
        cost_estimate=cost,
    )(x2, w_prep)

    # (C*B, O, 1) -> (B, C, O, 1)  (tiny; matches v_j.squeeze(1) of the reference)
    return jnp.transpose(out.reshape(C, B, O, 1), (1, 0, 2, 3))


def _reference_forward(x, W):
    """Pure-JAX transcription of the PyTorch forward (for correctness check)."""
    u_hat = jnp.einsum('rcoi,bri->brco', W, x)                    # (B, R, C, O)
    b_ij = jnp.zeros((W.shape[0], W.shape[1]), jnp.float32)       # (R, C)
    v_j = None
    for it in range(NUM_ROUTING_ITERATIONS):
        c_ij = jax.nn.softmax(b_ij, axis=0)                       # softmax over routes
        s_j = jnp.sum(c_ij[None, :, :, None] * u_hat, axis=1)     # (B, C, O)
        sq = s_j * s_j
        v_j = sq * s_j / ((1.0 + sq) * jnp.sqrt(sq))
        if it < NUM_ROUTING_ITERATIONS - 1:
            a_ij = jnp.einsum('brco,bco->brc', u_hat, v_j)
            b_ij = b_ij + jnp.mean(a_ij, axis=0)
    return v_j[..., None]                                         # (B, C, O, 1)


if __name__ == "__main__":
    # Small, module-consistent shapes: batch=2, routes=128, capsules=10, in=8, out=16.
    B, ROUTES, CAPS, IN_CH, OUT_CH = 2, 128, 10, 8, 16

    key = jax.random.PRNGKey(0)
    kx, kw = jax.random.split(key)
    x = jax.random.normal(kx, (B, ROUTES, IN_CH), dtype=jnp.float32)
    # Deterministic stand-in for nn.Parameter(torch.randn(1, R, C, O, I)) (leading 1 squeezed).
    W = jax.random.normal(kw, (ROUTES, CAPS, OUT_CH, IN_CH), dtype=jnp.float32)

    w_prep = prepare_digitcaps_weight(W)           # one-time, outside the hot path
    out = jax.block_until_ready(jax.jit(digit_caps_forward)(x, w_prep))
    ref = jax.block_until_ready(_reference_forward(x, W))

    assert out.shape == (B, CAPS, OUT_CH, 1), out.shape
    np.testing.assert_allclose(np.asarray(out), np.asarray(ref), rtol=2e-3, atol=2e-3)
    print("KERNEL_OK")
</pallas_src>

<mosaic_0001>
module attributes {stable_mosaic.version = 11 : i64} {
  func.func @_digitcaps_kernel(%arg0: i32, %arg1: memref<16x128xf32, #tpu.memory_space<vmem>>, %arg2: memref<80x16x128xf32, #tpu.memory_space<vmem>>, %arg3: memref<20x16x1xf32, #tpu.memory_space<vmem>>) attributes {dimension_semantics = [#tpu.dimension_semantics<arbitrary>], iteration_bounds = array<i64: 1>, scalar_prefetch = 0 : i64, scratch_operands = 0 : i64, tpu.core_type = #tpu.core_type<tc>, window_params = [{pipeline_mode = #tpu.pipeline_mode<synchronous>, transform_indices = @transform_0, window_bounds = array<i64: 16, 128>}, {pipeline_mode = #tpu.pipeline_mode<synchronous>, transform_indices = @transform_1, window_bounds = array<i64: 80, 16, 128>}, {pipeline_mode = #tpu.pipeline_mode<synchronous>, transform_indices = @transform_2, window_bounds = array<i64: 20, 16, 1>}]} {
    %c0_i32 = arith.constant 0 : i32
    %c10_i32 = arith.constant 10 : i32
    %0 = arith.addi %c0_i32, %c10_i32 : i32
    %c1_i32 = arith.constant 1 : i32
    scf.for %arg4 = %c0_i32 to %0 step %c1_i32  : i32 {
      %c1_i32_1 = arith.constant 1 : i32
      %1 = arith.muli %arg4, %c1_i32_1 : i32
      %c0_i32_2 = arith.constant 0 : i32
      %2 = arith.addi %c0_i32_2, %1 : i32
      %c8_i32 = arith.constant 8 : i32
      %3 = arith.muli %2, %c8_i32 : i32
      %c0_i32_3 = arith.constant 0 : i32
      %4 = arith.addi %3, %c0_i32_3 : i32
      %5 = arith.index_cast %4 : i32 to index
      %c0 = arith.constant 0 : index
      %c0_4 = arith.constant 0 : index
      %6 = vector.load %arg2[%5, %c0, %c0_4] : memref<80x16x128xf32, #tpu.memory_space<vmem>>, vector<1x16x128xf32>
      %7 = vector.shape_cast %6 : vector<1x16x128xf32> to vector<16x128xf32>
      %c0_5 = arith.constant 0 : index
      %c0_6 = arith.constant 0 : index
      %8 = vector.load %arg1[%c0_5, %c0_6] : memref<16x128xf32, #tpu.memory_space<vmem>>, vector<1x128xf32>
      %9 = vector.broadcast %8 : vector<1x128xf32> to vector<16x128xf32>
      %10 = arith.mulf %7, %9 : vector<16x128xf32>
      %c8_i32_7 = arith.constant 8 : i32
      %11 = arith.muli %2, %c8_i32_7 : i32
      %c1_i32_8 = arith.constant 1 : i32
      %12 = arith.addi %11, %c1_i32_8 : i32
      %13 = arith.index_cast %12 : i32 to index
      %c0_9 = arith.constant 0 : index
      %c0_10 = arith.constant 0 : index
      %14 = vector.load %arg2[%13, %c0_9, %c0_10] : memref<80x16x128xf32, #tpu.memory_space<vmem>>, vector<1x16x128xf32>
      %15 = vector.shape_cast %14 : vector<1x16x128xf32> to vector<16x128xf32>
      %c1 = arith.constant 1 : index
      %c0_11 = arith.constant 0 : index
      %16 = vector.load %arg1[%c1, %c0_11] : memref<16x128xf32, #tpu.memory_space<vmem>>, vector<1x128xf32>
      %17 = vector.broadcast %16 : vector<1x128xf32> to vector<16x128xf32>
      %18 = arith.mulf %15, %17 : vector<16x128xf32>
      %19 = arith.addf %10, %18 : vector<16x128xf32>
      %c8_i32_12 = arith.constant 8 : i32
      %20 = arith.muli %2, %c8_i32_12 : i32
      %c2_i32 = arith.constant 2 : i32
      %21 = arith.addi %20, %c2_i32 : i32
      %22 = arith.index_cast %21 : i32 to index
      %c0_13 = arith.constant 0 : index
      %c0_14 = arith.constant 0 : index
      %23 = vector.load %arg2[%22, %c0_13, %c0_14] : memref<80x16x128xf32, #tpu.memory_space<vmem>>, vector<1x16x128xf32>
      %24 = vector.shape_cast %23 : vector<1x16x128xf32> to vector<16x128xf32>
      %c2 = arith.constant 2 : index
      %c0_15 = arith.constant 0 : index
      %25 = vector.load %arg1[%c2, %c0_15] : memref<16x128xf32, #tpu.memory_space<vmem>>, vector<1x128xf32>
      %26 = vector.broadcast %25 : vector<1x128xf32> to vector<16x128xf32>
      %27 = arith.mulf %24, %26 : vector<16x128xf32>
      %28 = arith.addf %19, %27 : vector<16x128xf32>
      %c8_i32_16 = arith.constant 8 : i32
      %29 = arith.muli %2, %c8_i32_16 : i32
      %c3_i32 = arith.constant 3 : i32
      %30 = arith.addi %29, %c3_i32 : i32
      %31 = arith.index_cast %30 : i32 to index
      %c0_17 = arith.constant 0 : index
      %c0_18 = arith.constant 0 : index
      %32 = vector.load %arg2[%31, %c0_17, %c0_18] : memref<80x16x128xf32, #tpu.memory_space<vmem>>, vector<1x16x128xf32>
      %33 = vector.shape_cast %32 : vector<1x16x128xf32> to vector<16x128xf32>
      %c3 = arith.constant 3 : index
      %c0_19 = arith.constant 0 : index
      %34 = vector.load %arg1[%c3, %c0_19] : memref<16x128xf32, #tpu.memory_space<vmem>>, vector<1x128xf32>
      %35 = vector.broadcast %34 : vector<1x128xf32> to vector<16x128xf32>
      %36 = arith.mulf %33, %35 : vector<16x128xf32>
      %37 = arith.addf %28, %36 : vector<16x128xf32>
      %c8_i32_20 = arith.constant 8 : i32
      %38 = arith.muli %2, %c8_i32_20 : i32
      %c4_i32 = arith.constant 4 : i32
      %39 = arith.addi %38, %c4_i32 : i32
      %40 = arith.index_cast %39 : i32 to index
      %c0_21 = arith.constant 0 : index
      %c0_22 = arith.constant 0 : index
      %41 = vector.load %arg2[%40, %c0_21, %c0_22] : memref<80x16x128xf32, #tpu.memory_space<vmem>>, vector<1x16x128xf32>
      %42 = vector.shape_cast %41 : vector<1x16x128xf32> to vector<16x128xf32>
      %c4 = arith.constant 4 : index
      %c0_23 = arith.constant 0 : index
      %43 = vector.load %arg1[%c4, %c0_23] : memref<16x128xf32, #tpu.memory_space<vmem>>, vector<1x128xf32>
      %44 = vector.broadcast %43 : vector<1x128xf32> to vector<16x128xf32>
      %45 = arith.mulf %42, %44 : vector<16x128xf32>
      %46 = arith.addf %37, %45 : vector<16x128xf32>
      %c8_i32_24 = arith.constant 8 : i32
      %47 = arith.muli %2, %c8_i32_24 : i32
      %c5_i32 = arith.constant 5 : i32
      %48 = arith.addi %47, %c5_i32 : i32
      %49 = arith.index_cast %48 : i32 to index
      %c0_25 = arith.constant 0 : index
      %c0_26 = arith.constant 0 : index
      %50 = vector.load %arg2[%49, %c0_25, %c0_26] : memref<80x16x128xf32, #tpu.memory_space<vmem>>, vector<1x16x128xf32>
      %51 = vector.shape_cast %50 : vector<1x16x128xf32> to vector<16x128xf32>
      %c5 = arith.constant 5 : index
      %c0_27 = arith.constant 0 : index
      %52 = vector.load %arg1[%c5, %c0_27] : memref<16x128xf32, #tpu.memory_space<vmem>>, vector<1x128xf32>
      %53 = vector.broadcast %52 : vector<1x128xf32> to vector<16x128xf32>
      %54 = arith.mulf %51, %53 : vector<16x128xf32>
      %55 = arith.addf %46, %54 : vector<16x128xf32>
      %c8_i32_28 = arith.constant 8 : i32
      %56 = arith.muli %2, %c8_i32_28 : i32
      %c6_i32 = arith.constant 6 : i32
      %57 = arith.addi %56, %c6_i32 : i32
      %58 = arith.index_cast %57 : i32 to index
      %c0_29 = arith.constant 0 : index
      %c0_30 = arith.constant 0 : index
      %59 = vector.load %arg2[%58, %c0_29, %c0_30] : memref<80x16x128xf32, #tpu.memory_space<vmem>>, vector<1x16x128xf32>
      %60 = vector.shape_cast %59 : vector<1x16x128xf32> to vector<16x128xf32>
      %c6 = arith.constant 6 : index
      %c0_31 = arith.constant 0 : index
      %61 = vector.load %arg1[%c6, %c0_31] : memref<16x128xf32, #tpu.memory_space<vmem>>, vector<1x128xf32>
      %62 = vector.broadcast %61 : vector<1x128xf32> to vector<16x128xf32>
      %63 = arith.mulf %60, %62 : vector<16x128xf32>
      %64 = arith.addf %55, %63 : vector<16x128xf32>
      %c8_i32_32 = arith.constant 8 : i32
      %65 = arith.muli %2, %c8_i32_32 : i32
      %c7_i32 = arith.constant 7 : i32
      %66 = arith.addi %65, %c7_i32 : i32
      %67 = arith.index_cast %66 : i32 to index
      %c0_33 = arith.constant 0 : index
      %c0_34 = arith.constant 0 : index
      %68 = vector.load %arg2[%67, %c0_33, %c0_34] : memref<80x16x128xf32, #tpu.memory_space<vmem>>, vector<1x16x128xf32>
      %69 = vector.shape_cast %68 : vector<1x16x128xf32> to vector<16x128xf32>
      %c7 = arith.constant 7 : index
      %c0_35 = arith.constant 0 : index
      %70 = vector.load %arg1[%c7, %c0_35] : memref<16x128xf32, #tpu.memory_space<vmem>>, vector<1x128xf32>
      %71 = vector.broadcast %70 : vector<1x128xf32> to vector<16x128xf32>
      %72 = arith.mulf %69, %71 : vector<16x128xf32>
      %73 = arith.addf %64, %72 : vector<16x128xf32>
      %c8_i32_36 = arith.constant 8 : i32
      %74 = arith.muli %2, %c8_i32_36 : i32
      %c0_i32_37 = arith.constant 0 : i32
      %75 = arith.addi %74, %c0_i32_37 : i32
      %76 = arith.index_cast %75 : i32 to index
      %c0_38 = arith.constant 0 : index
      %c0_39 = arith.constant 0 : index
      %77 = vector.load %arg2[%76, %c0_38, %c0_39] : memref<80x16x128xf32, #tpu.memory_space<vmem>>, vector<1x16x128xf32>
      %78 = vector.shape_cast %77 : vector<1x16x128xf32> to vector<16x128xf32>
      %c8 = arith.constant 8 : index
      %c0_40 = arith.constant 0 : index
      %79 = vector.load %arg1[%c8, %c0_40] : memref<16x128xf32, #tpu.memory_space<vmem>>, vector<1x128xf32>
      %80 = vector.broadcast %79 : vector<1x128xf32> to vector<16x128xf32>
      %81 = arith.mulf %78, %80 : vector<16x128xf32>
      %c8_i32_41 = arith.constant 8 : i32
      %82 = arith.muli %2, %c8_i32_41 : i32
      %c1_i32_42 = arith.constant 1 : i32
      %83 = arith.addi %82, %c1_i32_42 : i32
      %84 = arith.index_cast %83 : i32 to index
      %c0_43 = arith.constant 0 : index
      %c0_44 = arith.constant 0 : index
      %85 = vector.load %arg2[%84, %c0_43, %c0_44] : memref<80x16x128xf32, #tpu.memory_space<vmem>>, vector<1x16x128xf32>
      %86 = vector.shape_cast %85 : vector<1x16x128xf32> to vector<16x128xf32>
      %c9 = arith.constant 9 : index
      %c0_45 = arith.constant 0 : index
      %87 = vector.load %arg1[%c9, %c0_45] : memref<16x128xf32, #tpu.memory_space<vmem>>, vector<1x128xf32>
      %88 = vector.broadcast %87 : vector<1x128xf32> to vector<16x128xf32>
      %89 = arith.mulf %86, %88 : vector<16x128xf32>
      %90 = arith.addf %81, %89 : vector<16x128xf32>
      %c8_i32_46 = arith.constant 8 : i32
      %91 = arith.muli %2, %c8_i32_46 : i32
      %c2_i32_47 = arith.constant 2 : i32
      %92 = arith.addi %91, %c2_i32_47 : i32
      %93 = arith.index_cast %92 : i32 to index
      %c0_48 = arith.constant 0 : index
      %c0_49 = arith.constant 0 : index
      %94 = vector.load %arg2[%93, %c0_48, %c0_49] : memref<80x16x128xf32, #tpu.memory_space<vmem>>, vector<1x16x128xf32>
      %95 = vector.shape_cast %94 : vector<1x16x128xf32> to vector<16x128xf32>
      %c10 = arith.constant 10 : index
      %c0_50 = arith.constant 0 : index
      %96 = vector.load %arg1[%c10, %c0_50] : memref<16x128xf32, #tpu.memory_space<vmem>>, vector<1x128xf32>
      %97 = vector.broadcast %96 : vector<1x128xf32> to vector<16x128xf32>
      %98 = arith.mulf %95, %97 : vector<16x128xf32>
      %99 = arith.addf %90, %98 : vector<16x128xf32>
      %c8_i32_51 = arith.constant 8 : i32
      %100 = arith.muli %2, %c8_i32_51 : i32
      %c3_i32_52 = arith.constant 3 : i32
      %101 = arith.addi %100, %c3_i32_52 : i32
      %102 = arith.index_cast %101 : i32 to index
      %c0_53 = arith.constant 0 : index
      %c0_54 = arith.constant 0 : index
      %103 = vector.load %arg2[%102, %c0_53, %c0_54] : memref<80x16x128xf32, #tpu.memory_space<vmem>>, vector<1x16x128xf32>
      %104 = vector.shape_cast %103 : vector<1x16x128xf32> to vector<16x128xf32>
      %c11 = arith.constant 11 : index
      %c0_55 = arith.constant 0 : index
      %105 = vector.load %arg1[%c11, %c0_55] : memref<16x128xf32, #tpu.memory_space<vmem>>, vector<1x128xf32>
      %106 = vector.broadcast %105 : vector<1x128xf32> to vector<16x128xf32>
      %107 = arith.mulf %104, %106 : vector<16x128xf32>
      %108 = arith.addf %99, %107 : vector<16x128xf32>
      %c8_i32_56 = arith.constant 8 : i32
      %109 = arith.muli %2, %c8_i32_56 : i32
      %c4_i32_57 = arith.constant 4 : i32
      %110 = arith.addi %109, %c4_i32_57 : i32
      %111 = arith.index_cast %110 : i32 to index
      %c0_58 = arith.constant 0 : index
      %c0_59 = arith.constant 0 : index
      %112 = vector.load %arg2[%111, %c0_58, %c0_59] : memref<80x16x128xf32, #tpu.memory_space<vmem>>, vector<1x16x128xf32>
      %113 = vector.shape_cast %112 : vector<1x16x128xf32> to vector<16x128xf32>
      %c12 = arith.constant 12 : index
      %c0_60 = arith.constant 0 : index
      %114 = vector.load %arg1[%c12, %c0_60] : memref<16x128xf32, #tpu.memory_space<vmem>>, vector<1x128xf32>
      %115 = vector.broadcast %114 : vector<1x128xf32> to vector<16x128xf32>
      %116 = arith.mulf %113, %115 : vector<16x128xf32>
      %117 = arith.addf %108, %116 : vector<16x128xf32>
      %c8_i32_61 = arith.constant 8 : i32
      %118 = arith.muli %2, %c8_i32_61 : i32
      %c5_i32_62 = arith.constant 5 : i32
      %119 = arith.addi %118, %c5_i32_62 : i32
      %120 = arith.index_cast %119 : i32 to index
      %c0_63 = arith.constant 0 : index
      %c0_64 = arith.constant 0 : index
      %121 = vector.load %arg2[%120, %c0_63, %c0_64] : memref<80x16x128xf32, #tpu.memory_space<vmem>>, vector<1x16x128xf32>
      %122 = vector.shape_cast %121 : vector<1x16x128xf32> to vector<16x128xf32>
      %c13 = arith.constant 13 : index
      %c0_65 = arith.constant 0 : index
      %123 = vector.load %arg1[%c13, %c0_65] : memref<16x128xf32, #tpu.memory_space<vmem>>, vector<1x128xf32>
      %124 = vector.broadcast %123 : vector<1x128xf32> to vector<16x128xf32>
      %125 = arith.mulf %122, %124 : vector<16x128xf32>
      %126 = arith.addf %117, %125 : vector<16x128xf32>
      %c8_i32_66 = arith.constant 8 : i32
      %127 = arith.muli %2, %c8_i32_66 : i32
      %c6_i32_67 = arith.constant 6 : i32
      %128 = arith.addi %127, %c6_i32_67 : i32
      %129 = arith.index_cast %128 : i32 to index
      %c0_68 = arith.constant 0 : index
      %c0_69 = arith.constant 0 : index
      %130 = vector.load %arg2[%129, %c0_68, %c0_69] : memref<80x16x128xf32, #tpu.memory_space<vmem>>, vector<1x16x128xf32>
      %131 = vector.shape_cast %130 : vector<1x16x128xf32> to vector<16x128xf32>
      %c14 = arith.constant 14 : index
      %c0_70 = arith.constant 0 : index
      %132 = vector.load %arg1[%c14, %c0_70] : memref<16x128xf32, #tpu.memory_space<vmem>>, vector<1x128xf32>
      %133 = vector.broadcast %132 : vector<1x128xf32> to vector<16x128xf32>
      %134 = arith.mulf %131, %133 : vector<16x128xf32>
      %135 = arith.addf %126, %134 : vector<16x128xf32>
      %c8_i32_71 = arith.constant 8 : i32
      %136 = arith.muli %2, %c8_i32_71 : i32
      %c7_i32_72 = arith.constant 7 : i32
      %137 = arith.addi %136, %c7_i32_72 : i32
      %138 = arith.index_cast %137 : i32 to index
      %c0_73 = arith.constant 0 : index
      %c0_74 = arith.constant 0 : index
      %139 = vector.load %arg2[%138, %c0_73, %c0_74] : memref<80x16x128xf32, #tpu.memory_space<vmem>>, vector<1x16x128xf32>
      %140 = vector.shape_cast %139 : vector<1x16x128xf32> to vector<16x128xf32>
      %c15 = arith.constant 15 : index
      %c0_75 = arith.constant 0 : index
      %141 = vector.load %arg1[%c15, %c0_75] : memref<16x128xf32, #tpu.memory_space<vmem>>, vector<1x128xf32>
      %142 = vector.broadcast %141 : vector<1x128xf32> to vector<16x128xf32>
      %143 = arith.mulf %140, %142 : vector<16x128xf32>
      %144 = arith.addf %135, %143 : vector<16x128xf32>
      %cst = arith.constant 0.000000e+00 : f32
      %145 = vector.broadcast %cst : f32 to vector<1x128xf32>
      %cst_76 = arith.constant dense<0.000000e+00> : vector<16xf32>
      %146 = vector.multi_reduction <add>, %73, %cst_76 [1] : vector<16x128xf32> to vector<16xf32>
      %147 = vector.shape_cast %146 : vector<16xf32> to vector<16x1xf32>
      %cst_77 = arith.constant 7.812500e-03 : f32
      %148 = vector.broadcast %cst_77 : f32 to vector<16x1xf32>
      %149 = arith.mulf %147, %148 : vector<16x1xf32>
      %cst_78 = arith.constant dense<0.000000e+00> : vector<16xf32>
      %150 = vector.multi_reduction <add>, %144, %cst_78 [1] : vector<16x128xf32> to vector<16xf32>
      %151 = vector.shape_cast %150 : vector<16xf32> to vector<16x1xf32>
      %cst_79 = arith.constant 7.812500e-03 : f32
      %152 = vector.broadcast %cst_79 : f32 to vector<16x1xf32>
      %153 = arith.mulf %151, %152 : vector<16x1xf32>
      %154 = math.absf %149 : vector<16x1xf32>
      %155 = arith.mulf %149, %154 : vector<16x1xf32>
      %156 = arith.mulf %149, %149 : vector<16x1xf32>
      %cst_80 = arith.constant 1.000000e+00 : f32
      %157 = vector.broadcast %cst_80 : f32 to vector<16x1xf32>
      %158 = arith.addf %157, %156 : vector<16x1xf32>
      %159 = arith.divf %155, %158 : vector<16x1xf32>
      %160 = math.absf %153 : vector<16x1xf32>
      %161 = arith.mulf %153, %160 : vector<16x1xf32>
      %162 = arith.mulf %153, %153 : vector<16x1xf32>
      %cst_81 = arith.constant 1.000000e+00 : f32
      %163 = vector.broadcast %cst_81 : f32 to vector<16x1xf32>
      %164 = arith.addf %163, %162 : vector<16x1xf32>
      %165 = arith.divf %161, %164 : vector<16x1xf32>
      %166 = vector.broadcast %159 : vector<16x1xf32> to vector<16x128xf32>
      %167 = arith.mulf %73, %166 : vector<16x128xf32>
      %cst_82 = arith.constant dense<0.000000e+00> : vector<128xf32>
      %168 = vector.multi_reduction <add>, %167, %cst_82 [0] : vector<16x128xf32> to vector<128xf32>
      %169 = vector.shape_cast %168 : vector<128xf32> to vector<1x128xf32>
      %170 = vector.broadcast %165 : vector<16x1xf32> to vector<16x128xf32>
      %171 = arith.mulf %144, %170 : vector<16x128xf32>
      %cst_83 = arith.constant dense<0.000000e+00> : vector<128xf32>
      %172 = vector.multi_reduction <add>, %171, %cst_83 [0] : vector<16x128xf32> to vector<128xf32>
      %173 = vector.shape_cast %172 : vector<128xf32> to vector<1x128xf32>
      %174 = arith.addf %169, %173 : vector<1x128xf32>
      %cst_84 = arith.constant 5.000000e-01 : f32
      %175 = vector.broadcast %cst_84 : f32 to vector<1x128xf32>
      %176 = arith.mulf %174, %175 : vector<1x128xf32>
      %177 = arith.addf %145, %176 : vector<1x128xf32>
      %cst_85 = arith.constant dense<0xFF800000> : vector<1xf32>
      %178 = vector.multi_reduction <maximumf>, %177, %cst_85 [1] : vector<1x128xf32> to vector<1xf32>
      %179 = vector.shape_cast %178 : vector<1xf32> to vector<1x1xf32>
      %180 = vector.broadcast %179 : vector<1x1xf32> to vector<1x128xf32>
      %181 = arith.subf %177, %180 : vector<1x128xf32>
      %182 = math.exp %181 : vector<1x128xf32>
      %cst_86 = arith.constant dense<0.000000e+00> : vector<1xf32>
      %183 = vector.multi_reduction <add>, %182, %cst_86 [1] : vector<1x128xf32> to vector<1xf32>
      %184 = vector.shape_cast %183 : vector<1xf32> to vector<1x1xf32>
      %cst_87 = arith.constant 1.000000e+00 : f32
      %185 = vector.broadcast %cst_87 : f32 to vector<1x1xf32>
      %186 = arith.divf %185, %184 : vector<1x1xf32>
      %187 = vector.broadcast %182 : vector<1x128xf32> to vector<16x128xf32>
      %188 = arith.mulf %73, %187 : vector<16x128xf32>
      %cst_88 = arith.constant dense<0.000000e+00> : vector<16xf32>
      %189 = vector.multi_reduction <add>, %188, %cst_88 [1] : vector<16x128xf32> to vector<16xf32>
      %190 = vector.shape_cast %189 : vector<16xf32> to vector<16x1xf32>
      %191 = vector.broadcast %186 : vector<1x1xf32> to vector<16x1xf32>
      %192 = arith.mulf %190, %191 : vector<16x1xf32>
      %193 = vector.broadcast %182 : vector<1x128xf32> to vector<16x128xf32>
      %194 = arith.mulf %144, %193 : vector<16x128xf32>
      %cst_89 = arith.constant dense<0.000000e+00> : vector<16xf32>
      %195 = vector.multi_reduction <add>, %194, %cst_89 [1] : vector<16x128xf32> to vector<16xf32>
      %196 = vector.shape_cast %195 : vector<16xf32> to vector<16x1xf32>
      %197 = vector.broadcast %186 : vector<1x1xf32> to vector<16x1xf32>
      %198 = arith.mulf %196, %197 : vector<16x1xf32>
      %199 = math.absf %192 : vector<16x1xf32>
      %200 = arith.mulf %192, %199 : vector<16x1xf32>
      %201 = arith.mulf %192, %192 : vector<16x1xf32>
      %cst_90 = arith.constant 1.000000e+00 : f32
      %202 = vector.broadcast %cst_90 : f32 to vector<16x1xf32>
      %203 = arith.addf %202, %201 : vector<16x1xf32>
      %204 = arith.divf %200, %203 : vector<16x1xf32>
      %205 = math.absf %198 : vector<16x1xf32>
      %206 = arith.mulf %198, %205 : vector<16x1xf32>
      %207 = arith.mulf %198, %198 : vector<16x1xf32>
      %cst_91 = arith.constant 1.000000e+00 : f32
      %208 = vector.broadcast %cst_91 : f32 to vector<16x1xf32>
      %209 = arith.addf %208, %207 : vector<16x1xf32>
      %210 = arith.divf %206, %209 : vector<16x1xf32>
      %211 = vector.broadcast %204 : vector<16x1xf32> to vector<16x128xf32>
      %212 = arith.mulf %73, %211 : vector<16x128xf32>
      %cst_92 = arith.constant dense<0.000000e+00> : vector<128xf32>
      %213 = vector.multi_reduction <add>, %212, %cst_92 [0] : vector<16x128xf32> to vector<128xf32>
      %214 = vector.shape_cast %213 : vector<128xf32> to vector<1x128xf32>
      %215 = vector.broadcast %210 : vector<16x1xf32> to vector<16x128xf32>
      %216 = arith.mulf %144, %215 : vector<16x128xf32>
      %cst_93 = arith.constant dense<0.000000e+00> : vector<128xf32>
      %217 = vector.multi_reduction <add>, %216, %cst_93 [0] : vector<16x128xf32> to vector<128xf32>
      %218 = vector.shape_cast %217 : vector<128xf32> to vector<1x128xf32>
      %219 = arith.addf %214, %218 : vector<1x128xf32>
      %cst_94 = arith.constant 5.000000e-01 : f32
      %220 = vector.broadcast %cst_94 : f32 to vector<1x128xf32>
      %221 = arith.mulf %219, %220 : vector<1x128xf32>
      %222 = arith.addf %177, %221 : vector<1x128xf32>
      %cst_95 = arith.constant dense<0xFF800000> : vector<1xf32>
      %223 = vector.multi_reduction <maximumf>, %222, %cst_95 [1] : vector<1x128xf32> to vector<1xf32>
      %224 = vector.shape_cast %223 : vector<1xf32> to vector<1x1xf32>
      %225 = vector.broadcast %224 : vector<1x1xf32> to vector<1x128xf32>
      %226 = arith.subf %222, %225 : vector<1x128xf32>
      %227 = math.exp %226 : vector<1x128xf32>
      %cst_96 = arith.constant dense<0.000000e+00> : vector<1xf32>
      %228 = vector.multi_reduction <add>, %227, %cst_96 [1] : vector<1x128xf32> to vector<1xf32>
      %229 = vector.shape_cast %228 : vector<1xf32> to vector<1x1xf32>
      %cst_97 = arith.constant 1.000000e+00 : f32
      %230 = vector.broadcast %cst_97 : f32 to vector<1x1xf32>
      %231 = arith.divf %230, %229 : vector<1x1xf32>
      %232 = vector.broadcast %227 : vector<1x128xf32> to vector<16x128xf32>
      %233 = arith.mulf %73, %232 : vector<16x128xf32>
      %cst_98 = arith.constant dense<0.000000e+00> : vector<16xf32>
      %234 = vector.multi_reduction <add>, %233, %cst_98 [1] : vector<16x128xf32> to vector<16xf32>
      %235 = vector.shape_cast %234 : vector<16xf32> to vector<16x1xf32>
      %236 = vector.broadcast %231 : vector<1x1xf32> to vector<16x1xf32>
      %237 = arith.mulf %235, %236 : vector<16x1xf32>
      %238 = vector.broadcast %227 : vector<1x128xf32> to vector<16x128xf32>
      %239 = arith.mulf %144, %238 : vector<16x128xf32>
      %cst_99 = arith.constant dense<0.000000e+00> : vector<16xf32>
      %240 = vector.multi_reduction <add>, %239, %cst_99 [1] : vector<16x128xf32> to vector<16xf32>
      %241 = vector.shape_cast %240 : vector<16xf32> to vector<16x1xf32>
      %242 = vector.broadcast %231 : vector<1x1xf32> to vector<16x1xf32>
      %243 = arith.mulf %241, %242 : vector<16x1xf32>
      %244 = math.absf %237 : vector<16x1xf32>
      %245 = arith.mulf %237, %244 : vector<16x1xf32>
      %246 = arith.mulf %237, %237 : vector<16x1xf32>
      %cst_100 = arith.constant 1.000000e+00 : f32
      %247 = vector.broadcast %cst_100 : f32 to vector<16x1xf32>
      %248 = arith.addf %247, %246 : vector<16x1xf32>
      %249 = arith.divf %245, %248 : vector<16x1xf32>
      %250 = math.absf %243 : vector<16x1xf32>
      %251 = arith.mulf %243, %250 : vector<16x1xf32>
      %252 = arith.mulf %243, %243 : vector<16x1xf32>
      %cst_101 = arith.constant 1.000000e+00 : f32
      %253 = vector.broadcast %cst_101 : f32 to vector<16x1xf32>
      %254 = arith.addf %253, %252 : vector<16x1xf32>
      %255 = arith.divf %251, %254 : vector<16x1xf32>
      %c2_i32_102 = arith.constant 2 : i32
      %256 = arith.muli %2, %c2_i32_102 : i32
      %c0_i32_103 = arith.constant 0 : i32
      %257 = arith.addi %256, %c0_i32_103 : i32
      %258 = arith.index_cast %257 : i32 to index
      %c0_104 = arith.constant 0 : index
      %c0_105 = arith.constant 0 : index
      %259 = vector.load %arg3[%258, %c0_104, %c0_105] : memref<20x16x1xf32, #tpu.memory_space<vmem>>, vector<1x16x1xf32>
      %260 = vector.shape_cast %259 : vector<1x16x1xf32> to vector<16x1xf32>
      %261 = vector.shape_cast %249 : vector<16x1xf32> to vector<1x16x1xf32>
      tpu.vector_store %arg3[%258, %c0_104, %c0_105], %261 {strides = array<i32>} : memref<20x16x1xf32, #tpu.memory_space<vmem>>, vector<1x16x1xf32>,
      %c2_i32_106 = arith.constant 2 : i32
      %262 = arith.muli %2, %c2_i32_106 : i32
      %c1_i32_107 = arith.constant 1 : i32
      %263 = arith.addi %262, %c1_i32_107 : i32
      %264 = arith.index_cast %263 : i32 to index
      %c0_108 = arith.constant 0 : index
      %c0_109 = arith.constant 0 : index
      %265 = vector.load %arg3[%264, %c0_108, %c0_109] : memref<20x16x1xf32, #tpu.memory_space<vmem>>, vector<1x16x1xf32>
      %266 = vector.shape_cast %265 : vector<1x16x1xf32> to vector<16x1xf32>
      %267 = vector.shape_cast %255 : vector<16x1xf32> to vector<1x16x1xf32>
      tpu.vector_store %arg3[%264, %c0_108, %c0_109], %267 {strides = array<i32>} : memref<20x16x1xf32, #tpu.memory_space<vmem>>, vector<1x16x1xf32>,
    }
    %c10_i32_0 = arith.constant 10 : i32
    return
  }
  func.func @transform_0(%arg0: i32) -> (i32, i32) {
    %c0_i32 = arith.constant 0 : i32
    %c0_i32_0 = arith.constant 0 : i32
    %c0_i32_1 = arith.constant 0 : i32
    return %c0_i32, %c0_i32_0 : i32, i32
  }
  func.func @transform_1(%arg0: i32) -> (i32, i32, i32) {
    %c0_i32 = arith.constant 0 : i32
    %c0_i32_0 = arith.constant 0 : i32
    %c0_i32_1 = arith.constant 0 : i32
    %c0_i32_2 = arith.constant 0 : i32
    return %c0_i32, %c0_i32_0, %c0_i32_1 : i32, i32, i32
  }
  func.func @transform_2(%arg0: i32) -> (i32, i32, i32) {
    %c0_i32 = arith.constant 0 : i32
    %c0_i32_0 = arith.constant 0 : i32
    %c0_i32_1 = arith.constant 0 : i32
    %c0_i32_2 = arith.constant 0 : i32
    return %c0_i32, %c0_i32_0, %c0_i32_1 : i32, i32, i32
  }
}

</mosaic_0001>

<llo_original>
// kernel: digit_caps_forward.1
$region0: #{digit_caps_forward.1}
  #allocation0 [shape = 'u32[]', space=smem, size = 0x4, offset = 0x4, fixed_abs, tag = 'smem constant byte address 0x4 - core index']
  #allocation1 [shape = 'u32[144,128]{1,0:T(1,128)}', space=vmem, size = 0x12000, scoped, tag = 'internal scratch']
  %s0 = inlined_call_operand.hbm [shape: f32[16,128], index: 0, kind: input, shape index: {}]
  %s1 = inlined_call_operand.hbm [shape: f32[80,16,128], index: 1, kind: input, shape index: {}]
  %s2 = inlined_call_operand.vmem [shape: f32[20,16,1], index: 2, kind: output, shape index: {}]
  %s3 = sld [smem:[#allocation0]]
  $region33: #{digit_caps_forward.1} parent=0
    _
  %s5 = ssub.s32 1, %s3
  %s6 = scalar_select 0, %s5, %s3
  $region1: #{digit_caps_forward.1} parent=0
    #allocation2 [shape = 'u8[8192]{0}', space=vmem, size = 0x2000, scoped, tag = 'input window, operand 0, single buffered']
    #allocation3 [shape = 's32[1]{0}', space=sflag, size = 0x4, scoped, tag = 'scoped memory for digit_caps_forward.1']
    #allocation4 [shape = 'u8[655360]{0}', space=vmem, size = 0xa0000, scoped, tag = 'input window, operand 1, single buffered']
    #allocation5 [shape = 's32[1]{0}', space=sflag, size = 0x4, scoped, tag = 'scoped memory for digit_caps_forward.1']
    %7 = vsyncpa [#allocation3], 0
    %8 = vsyncpa [#allocation5], 0
    // Predicated region
    $region2: #{digit_caps_forward.1} parent=1 // pred_check
      _
    $region3: #{digit_caps_forward.1} parent=1 // pred_check_branch
      %10 = sbr.rel (0) target = $region5
    $region4: #{digit_caps_forward.1} parent=1 // pred_region
      %s12 = ssub.s32 256, 256
      %13 = vsyncadd [#allocation3], %s12
      %s14 = sshll.u32 [#allocation2], 4
      %s15 = int_to_ptr.vmem [resolvable:$true] %s14
      %20 = dma.hbm_to_vmem [thread:$0]  %s0, 256, %s15, [#allocation3], 128, 128, 8
    $region5: #{digit_caps_forward.1} parent=1 // pred_fallthru
      _
    // Predicated region
    $region6: #{digit_caps_forward.1} parent=1 // pred_check
      _
    $region7: #{digit_caps_forward.1} parent=1 // pred_check_branch
      %22 = sbr.rel (0) target = $region9
    $region8: #{digit_caps_forward.1} parent=1 // pred_region
      %s24 = ssub.s32 20480, 20480
      %25 = vsyncadd [#allocation5], %s24
      %s26 = sshll.u32 [#allocation4], 4
      %s27 = int_to_ptr.vmem [resolvable:$true] %s26
      %32 = dma.hbm_to_vmem [thread:$0]  %s1, 20480, %s27, [#allocation5], 128, 128, 8
    $region9: #{digit_caps_forward.1} parent=1 // pred_fallthru
      _
    // Predicated region
    $region10: #{digit_caps_forward.1} parent=1 // pred_check
      _
    $region11: #{digit_caps_forward.1} parent=1 // pred_check_branch
      %34 = sbr.rel (0) target = $region13
    $region12: #{digit_caps_forward.1} parent=1 // pred_region
      %35 = dma.done [#allocation3], 256
    $region13: #{digit_caps_forward.1} parent=1 // pred_fallthru
      _
    // Predicated region
    $region14: #{digit_caps_forward.1} parent=1 // pred_check
      _
    $region15: #{digit_caps_forward.1} parent=1 // pred_check_branch
      %37 = sbr.rel (0) target = $region17
    $region16: #{digit_caps_forward.1} parent=1 // pred_region
      %38 = dma.done [#allocation5], 20480
    $region17: #{digit_caps_forward.1} parent=1 // pred_fallthru
      _
    loop: start=0, step=1, limit=10
    $region18: #{digit_caps_forward.1} parent=1 // loop_pre_header
      _
    $region19: #{digit_caps_forward.1} parent=1 // loop_header
      %s40 = sphi 0, %s44
      %p41 = scmp.ge.s32.totalorder %s40, 10
    $region20: #{digit_caps_forward.1} parent=1 // loop_header_branch
      %43 = sbr.rel (%p41) target = $region24
    $region21: #{digit_caps_forward.1} parent=1 // loop_body
      %s45 = smul.u32 %s40, 8
      %s46 = smul.u32 %s45, 16
      %s47 = scalar_lea.vmem [#allocation4], %s46
      %v48 = vld [vmem:[%s47] sm:$0xff]
      %v49 = vld [vmem:[%s47 + $0x8] sm:$0xff]
      %v50 = vld [vmem:[#allocation2] sm:$0x1]
      %v51 = vlaneseq
      %v52 = vshrl.u32 %v51, 7
      %v53 = vsub.s32 0, %v52
      %v54 = vrot.slane %v50, %v53
      %v55 = vmul.f32 %v48, %v54
      %v56 = vmul.f32 %v49, %v54
      %s57 = sadd.s32 %s45, 1
      %s58 = smul.u32 %s57, 16
      %s59 = scalar_lea.vmem [#allocation4], %s58
      %v60 = vld [vmem:[%s59] sm:$0xff]
      %v61 = vld [vmem:[%s59 + $0x8] sm:$0xff]
      %v62 = vld [vmem:[#allocation2 + $0x1] sm:$0x1]
      %v63 = vlaneseq
      %v64 = vshrl.u32 %v63, 7
      %v65 = vsub.s32 0, %v64
      %v66 = vrot.slane %v62, %v65
      %v67 = vmul.f32 %v60, %v66
      %v68 = vmul.f32 %v61, %v66
      %v69 = vadd.f32 %v55, %v67
      %v70 = vadd.f32 %v56, %v68
      %s71 = sadd.s32 %s45, 2
      %s72 = smul.u32 %s71, 16
      %s73 = scalar_lea.vmem [#allocation4], %s72
      %v74 = vld [vmem:[%s73] sm:$0xff]
      %v75 = vld [vmem:[%s73 + $0x8] sm:$0xff]
      %v76 = vld [vmem:[#allocation2 + $0x2] sm:$0x1]
      %v77 = vlaneseq
      %v78 = vshrl.u32 %v77, 7
      %v79 = vsub.s32 0, %v78
      %v80 = vrot.slane %v76, %v79
      %v81 = vmul.f32 %v74, %v80
      %v82 = vmul.f32 %v75, %v80
      %v83 = vadd.f32 %v69, %v81
      %v84 = vadd.f32 %v70, %v82
      %s85 = sadd.s32 %s45, 3
      %s86 = smul.u32 %s85, 16
      %s87 = scalar_lea.vmem [#allocation4], %s86
      %v88 = vld [vmem:[%s87] sm:$0xff]
      %v89 = vld [vmem:[%s87 + $0x8] sm:$0xff]
      %v90 = vld [vmem:[#allocation2 + $0x3] sm:$0x1]
      %v91 = vlaneseq
      %v92 = vshrl.u32 %v91, 7
      %v93 = vsub.s32 0, %v92
      %v94 = vrot.slane %v90, %v93
      %v95 = vmul.f32 %v88, %v94
      %v96 = vmul.f32 %v89, %v94
      %v97 = vadd.f32 %v83, %v95
      %v98 = vadd.f32 %v84, %v96
      %s99 = sadd.s32 %s45, 4
      %s100 = smul.u32 %s99, 16
      %s101 = scalar_lea.vmem [#allocation4], %s100
      %v102 = vld [vmem:[%s101] sm:$0xff]
      %v103 = vld [vmem:[%s101 + $0x8] sm:$0xff]
      %v104 = vld [vmem:[#allocation2 + $0x4] sm:$0x1]
      %v105 = vlaneseq
      %v106 = vshrl.u32 %v105, 7
      %v107 = vsub.s32 0, %v106
      %v108 = vrot.slane %v104, %v107
      %v109 = vmul.f32 %v102, %v108
      %v110 = vmul.f32 %v103, %v108
      %v111 = vadd.f32 %v97, %v109
      %v112 = vadd.f32 %v98, %v110
      %s113 = sadd.s32 %s45, 5
      %s114 = smul.u32 %s113, 16
      %s115 = scalar_lea.vmem [#allocation4], %s114
      %v116 = vld [vmem:[%s115] sm:$0xff]
      %v117 = vld [vmem:[%s115 + $0x8] sm:$0xff]
      %v118 = vld [vmem:[#allocation2 + $0x5] sm:$0x1]
      %v119 = vlaneseq
      %v120 = vshrl.u32 %v119, 7
      %v121 = vsub.s32 0, %v120
      %v122 = vrot.slane %v118, %v121
      %v123 = vmul.f32 %v116, %v122
      %v124 = vmul.f32 %v117, %v122
      %v125 = vadd.f32 %v111, %v123
      %v126 = vadd.f32 %v112, %v124
      %s127 = sadd.s32 %s45, 6
      %s128 = smul.u32 %s127, 16
      %s129 = scalar_lea.vmem [#allocation4], %s128
      %v130 = vld [vmem:[%s129] sm:$0xff]
      %v131 = vld [vmem:[%s129 + $0x8] sm:$0xff]
      %v132 = vld [vmem:[#allocation2 + $0x6] sm:$0x1]
      %v133 = vlaneseq
      %v134 = vshrl.u32 %v133, 7
      %v135 = vsub.s32 0, %v134
      %v136 = vrot.slane %v132, %v135
      %v137 = vmul.f32 %v130, %v136
      %v138 = vmul.f32 %v131, %v136
      %v139 = vadd.f32 %v125, %v137
      %v140 = vadd.f32 %v126, %v138
      %s141 = sadd.s32 %s45, 7
      %s142 = smul.u32 %s141, 16
      %s143 = scalar_lea.vmem [#allocation4], %s142
      %v144 = vld [vmem:[%s143] sm:$0xff]
      %v145 = vld [vmem:[%s143 + $0x8] sm:$0xff]
      %v146 = vld [vmem:[#allocation2 + $0x7] sm:$0x1]
      %v147 = vlaneseq
      %v148 = vshrl.u32 %v147, 7
      %v149 = vsub.s32 0, %v148
      %v150 = vrot.slane %v146, %v149
      %v151 = vmul.f32 %v144, %v150
      %v152 = vmul.f32 %v145, %v150
      %v153 = vadd.f32 %v139, %v151
      %v154 = vadd.f32 %v140, %v152
      %v155 = vld [vmem:[#allocation2 + $0x8] sm:$0x1]
      %v156 = vlaneseq
      %v157 = vshrl.u32 %v156, 7
      %v158 = vsub.s32 0, %v157
      %v159 = vrot.slane %v155, %v158
      %v160 = vmul.f32 %v48, %v159
      %v161 = vmul.f32 %v49, %v159
      %v162 = vld [vmem:[#allocation2 + $0x9] sm:$0x1]
      %v163 = vlaneseq
      %v164 = vshrl.u32 %v163, 7
      %v165 = vsub.s32 0, %v164
      %v166 = vrot.slane %v162, %v165
      %v167 = vmul.f32 %v60, %v166
      %v168 = vmul.f32 %v61, %v166
      %v169 = vadd.f32 %v160, %v167
      %v170 = vadd.f32 %v161, %v168
      %v171 = vld [vmem:[#allocation2 + $0xa] sm:$0x1]
      %v172 = vlaneseq
      %v173 = vshrl.u32 %v172, 7
      %v174 = vsub.s32 0, %v173
      %v175 = vrot.slane %v171, %v174
      %v176 = vmul.f32 %v74, %v175
      %v177 = vmul.f32 %v75, %v175
      %v178 = vadd.f32 %v169, %v176
      %v179 = vadd.f32 %v170, %v177
      %v180 = vld [vmem:[#allocation2 + $0xb] sm:$0x1]
      %v181 = vlaneseq
      %v182 = vshrl.u32 %v181, 7
      %v183 = vsub.s32 0, %v182
      %v184 = vrot.slane %v180, %v183
      %v185 = vmul.f32 %v88, %v184
      %v186 = vmul.f32 %v89, %v184
      %v187 = vadd.f32 %v178, %v185
      %v188 = vadd.f32 %v179, %v186
      %v189 = vld [vmem:[#allocation2 + $0xc] sm:$0x1]
      %v190 = vlaneseq
      %v191 = vshrl.u32 %v190, 7
      %v192 = vsub.s32 0, %v191
      %v193 = vrot.slane %v189, %v192
      %v194 = vmul.f32 %v102, %v193
      %v195 = vmul.f32 %v103, %v193
      %v196 = vadd.f32 %v187, %v194
      %v197 = vadd.f32 %v188, %v195
      %v198 = vld [vmem:[#allocation2 + $0xd] sm:$0x1]
      %v199 = vlaneseq
      %v200 = vshrl.u32 %v199, 7
      %v201 = vsub.s32 0, %v200
      %v202 = vrot.slane %v198, %v201
      %v203 = vmul.f32 %v116, %v202
      %v204 = vmul.f32 %v117, %v202
      %v205 = vadd.f32 %v196, %v203
      %v206 = vadd.f32 %v197, %v204
      %v207 = vld [vmem:[#allocation2 + $0xe] sm:$0x1]
      %v208 = vlaneseq
      %v209 = vshrl.u32 %v208, 7
      %v210 = vsub.s32 0, %v209
      %v211 = vrot.slane %v207, %v210
      %v212 = vmul.f32 %v130, %v211
      %v213 = vmul.f32 %v131, %v211
      %v214 = vadd.f32 %v205, %v212
      %v215 = vadd.f32 %v206, %v213
      %v216 = vld [vmem:[#allocation2 + $0xf] sm:$0x1]
      %v217 = vlaneseq
      %v218 = vshrl.u32 %v217, 7
      %v219 = vsub.s32 0, %v218
      %v220 = vrot.slane %v216, %v219
      %v221 = vmul.f32 %v144, %v220
      %v222 = vmul.f32 %v145, %v220
      %v223 = vadd.f32 %v214, %v221
      %v224 = vadd.f32 %v215, %v222
      %225 = vadd.xlane.f32.xlu0 %v153
      %v226 = vpop.xlane.xlu0 %225
      %227 = vadd.xlane.f32.xlu0 %v154
      %v228 = vpop.xlane.xlu0 %227
      %v229 = vmul.f32 %v226, 0.0078125
      %v230 = vmul.f32 %v228, 0.0078125
      %231 = vadd.xlane.f32.xlu0 %v223
      %v232 = vpop.xlane.xlu0 %231
      %233 = vadd.xlane.f32.xlu0 %v224
      %v234 = vpop.xlane.xlu0 %233
      %v235 = vmul.f32 %v232, 0.0078125
      %v236 = vmul.f32 %v234, 0.0078125
      %v237 = vand.u32 2147483647, %v229
      %v238 = vand.u32 2147483647, %v230
      %v239 = vmul.f32 %v229, %v237
      %v240 = vmul.f32 %v230, %v238
      %v241 = vmul.f32 %v229, %v229
      %v242 = vmul.f32 %v230, %v230
      %v243 = vadd.f32 %v241, 1.0
      %v244 = vadd.f32 %v242, 1.0
      %v245 = vrcp.pop %v243
      %v246 = vmul.f32 %v239, %v245
      %v247 = vrcp.pop %v244
      %v248 = vmul.f32 %v240, %v247
      %v249 = vand.u32 2147483647, %v235
      %v250 = vand.u32 2147483647, %v236
      %v251 = vmul.f32 %v235, %v249
      %v252 = vmul.f32 %v236, %v250
      %v253 = vmul.f32 %v235, %v235
      %v254 = vmul.f32 %v236, %v236
      %v255 = vadd.f32 %v253, 1.0
      %v256 = vadd.f32 %v254, 1.0
      %v257 = vrcp.pop %v255
      %v258 = vmul.f32 %v251, %v257
      %v259 = vrcp.pop %v256
      %v260 = vmul.f32 %v252, %v259
      %v261 = vmul.f32 %v153, %v246
      %v262 = vmul.f32 %v154, %v248
      %v263 = vadd.f32 %v261, %v262
      %v264 = vrot.slane %v263, 4
      %v265 = vadd.f32 %v263, %v264
      %v266 = vrot.slane %v265, 2
      %v267 = vadd.f32 %v265, %v266
      %v268 = vrot.slane %v267, 1
      %v269 = vadd.f32 %v267, %v268
      %v270 = vmul.f32 %v223, %v258
      %v271 = vmul.f32 %v224, %v260
      %v272 = vadd.f32 %v270, %v271
      %v273 = vrot.slane %v272, 4
      %v274 = vadd.f32 %v272, %v273
      %v275 = vrot.slane %v274, 2
      %v276 = vadd.f32 %v274, %v275
      %v277 = vrot.slane %v276, 1
      %v278 = vadd.f32 %v276, %v277
      %v279 = vadd.f32 %v269, %v278
      %v280 = vmul.f32 %v279, 0.5
      %v281 = vadd.f32 %v280, 0.0
      %282 = vmax.xlane.f32.xlu0 %v281
      %v283 = vpop.xlane.xlu0 %282
      %v284 = vsub.f32 %v281, %v283
      %v285 = vmul.f32 %v284, 1.442695
      %v286 = vpow.pop %v285
      %287 = vadd.xlane.f32.xlu0 %v286
      %v288 = vpop.xlane.xlu0 %287
      %v289 = vrcp.pop %v288
      %v290 = vmul.f32 1.0, %v289
      %v291 = vmul.f32 %v153, %v286
      %v292 = vmul.f32 %v154, %v286
      %293 = vadd.xlane.f32.xlu0 %v291
      %v294 = vpop.xlane.xlu0 %293
      %295 = vadd.xlane.f32.xlu0 %v292
      %v296 = vpop.xlane.xlu0 %295
      %v297 = vmul.f32 %v294, %v290
      %v298 = vmul.f32 %v296, %v290
      %v299 = vmul.f32 %v223, %v286
      %v300 = vmul.f32 %v224, %v286
      %301 = vadd.xlane.f32.xlu0 %v299
      %v302 = vpop.xlane.xlu0 %301
      %303 = vadd.xlane.f32.xlu0 %v300
      %v304 = vpop.xlane.xlu0 %303
      %v305 = vmul.f32 %v302, %v290
      %v306 = vmul.f32 %v304, %v290
      %v307 = vand.u32 2147483647, %v297
      %v308 = vand.u32 2147483647, %v298
      %v309 = vmul.f32 %v297, %v307
      %v310 = vmul.f32 %v298, %v308
      %v311 = vmul.f32 %v297, %v297
      %v312 = vmul.f32 %v298, %v298
      %v313 = vadd.f32 %v311, 1.0
      %v314 = vadd.f32 %v312, 1.0
      %v315 = vrcp.pop %v313
      %v316 = vmul.f32 %v309, %v315
      %v317 = vrcp.pop %v314
      %v318 = vmul.f32 %v310, %v317
      %v319 = vand.u32 2147483647, %v305
      %v320 = vand.u32 2147483647, %v306
      %v321 = vmul.f32 %v305, %v319
      %v322 = vmul.f32 %v306, %v320
      %v323 = vmul.f32 %v305, %v305
      %v324 = vmul.f32 %v306, %v306
      %v325 = vadd.f32 %v323, 1.0
      %v326 = vadd.f32 %v324, 1.0
      %v327 = vrcp.pop %v325
      %v328 = vmul.f32 %v321, %v327
      %v329 = vrcp.pop %v326
      %v330 = vmul.f32 %v322, %v329
      %v331 = vmul.f32 %v153, %v316
      %v332 = vmul.f32 %v154, %v318
      %v333 = vadd.f32 %v331, %v332
      %v334 = vrot.slane %v333, 4
      %v335 = vadd.f32 %v333, %v334
      %v336 = vrot.slane %v335, 2
      %v337 = vadd.f32 %v335, %v336
      %v338 = vrot.slane %v337, 1
      %v339 = vadd.f32 %v337, %v338
      %v340 = vmul.f32 %v223, %v328
      %v341 = vmul.f32 %v224, %v330
      %v342 = vadd.f32 %v340, %v341
      %v343 = vrot.slane %v342, 4
      %v344 = vadd.f32 %v342, %v343
      %v345 = vrot.slane %v344, 2
      %v346 = vadd.f32 %v344, %v345
      %v347 = vrot.slane %v346, 1
      %v348 = vadd.f32 %v346, %v347
      %v349 = vadd.f32 %v339, %v348
      %v350 = vmul.f32 %v349, 0.5
      %v351 = vadd.f32 %v281, %v350
      %352 = vmax.xlane.f32.xlu0 %v351
      %v353 = vpop.xlane.xlu0 %352
      %v354 = vsub.f32 %v351, %v353
      %v355 = vmul.f32 %v354, 1.442695
      %v356 = vpow.pop %v355
      %357 = vadd.xlane.f32.xlu0 %v356
      %v358 = vpop.xlane.xlu0 %357
      %v359 = vrcp.pop %v358
      %v360 = vmul.f32 1.0, %v359
      %v361 = vmul.f32 %v153, %v356
      %v362 = vmul.f32 %v154, %v356
      %363 = vadd.xlane.f32.xlu0 %v361
      %v364 = vpop.xlane.xlu0 %363
      %365 = vadd.xlane.f32.xlu0 %v362
      %v366 = vpop.xlane.xlu0 %365
      %v367 = vmul.f32 %v364, %v360
      %v368 = vmul.f32 %v366, %v360
      %v369 = vmul.f32 %v223, %v356
      %v370 = vmul.f32 %v224, %v356
      %371 = vadd.xlane.f32.xlu0 %v369
      %v372 = vpop.xlane.xlu0 %371
      %373 = vadd.xlane.f32.xlu0 %v370
      %v374 = vpop.xlane.xlu0 %373
      %v375 = vmul.f32 %v372, %v360
      %v376 = vmul.f32 %v374, %v360
      %v377 = vand.u32 2147483647, %v367
      %v378 = vand.u32 2147483647, %v368
      %v379 = vmul.f32 %v367, %v377
      %v380 = vmul.f32 %v368, %v378
      %v381 = vmul.f32 %v367, %v367
      %v382 = vmul.f32 %v368, %v368
      %v383 = vadd.f32 %v381, 1.0
      %v384 = vadd.f32 %v382, 1.0
      %v385 = vrcp.pop %v383
      %v386 = vmul.f32 %v379, %v385
      %v387 = vrcp.pop %v384
      %v388 = vmul.f32 %v380, %v387
      %v389 = vand.u32 2147483647, %v375
      %v390 = vand.u32 2147483647, %v376
      %v391 = vmul.f32 %v375, %v389
      %v392 = vmul.f32 %v376, %v390
      %v393 = vmul.f32 %v375, %v375
      %v394 = vmul.f32 %v376, %v376
      %v395 = vadd.f32 %v393, 1.0
      %v396 = vadd.f32 %v394, 1.0
      %v397 = vrcp.pop %v395
      %v398 = vmul.f32 %v391, %v397
      %v399 = vrcp.pop %v396
      %v400 = vmul.f32 %v392, %v399
      %s401 = smul.u32 %s40, 2
      %s402 = smul.u32 %s401, 16
      %s403 = scalar_lea.vmem %s2, %s402
      %vm404 = vcmask 7168
      %405 = vst.msk [vmem:[%s403] sm:$0xff] %vm404, %v386
      %406 = vst.msk [vmem:[%s403 + $0x8] sm:$0xff] %vm404, %v388
      %s407 = sadd.s32 %s401, 1
      %s408 = smul.u32 %s407, 16
      %s409 = scalar_lea.vmem %s2, %s408
      %410 = vst.msk [vmem:[%s409] sm:$0xff] %vm404, %v398
      %411 = vst.msk [vmem:[%s409 + $0x8] sm:$0xff] %vm404, %v400
    $region22: #{digit_caps_forward.1} parent=1 // loop_footer
      %s44 = sadd.s32 1, %s40
    $region23: #{digit_caps_forward.1} parent=1 // loop_footer_branch
      %39 = sbr.rel target = $region19
    $region24: #{digit_caps_forward.1} parent=1 // loop_exit
      _
    // Predicated region
    $region25: #{digit_caps_forward.1} parent=1 // pred_check
      _
    $region26: #{digit_caps_forward.1} parent=1 // pred_check_branch
      %413 = sbr.rel (0) target = $region28
    $region27: #{digit_caps_forward.1} parent=1 // pred_region
      _
    $region28: #{digit_caps_forward.1} parent=1 // pred_fallthru
      _
    // Predicated region
    $region29: #{digit_caps_forward.1} parent=1 // pred_check
      _
    $region30: #{digit_caps_forward.1} parent=1 // pred_check_branch
      %415 = sbr.rel (0) target = $region32
    $region31: #{digit_caps_forward.1} parent=1 // pred_region
      _
    $region32: #{digit_caps_forward.1} parent=1 // pred_fallthru
      _
    %416 = vsyncpa [#allocation3], 1
    %417 = vsyncpa [#allocation5], 1

</llo_original>
